<compile_context>
chip_gen: v6e
topology: v6e:2x2x1
jax: 0.10.0
libtpu: 0.0.40
codegen_flags: <defaults>
</compile_context>

<pallas_src>
import functools

import jax
import jax.numpy as jnp
from jax.experimental import pallas as pl
from jax.experimental.pallas import tpu as pltpu


def _dwconv_kernel(x_ref, w_ref, b_ref, o_ref, pad_ref, *, kh_size, kw_size,
                   stride, padding, in_h, in_w, out_h, out_w):
    """One (channel-tile, batch) block of depthwise conv.

    x_ref   : (1, TC, H, W)        input block (unpadded, NCHW)
    w_ref   : (TC, KH*KW, 1, 1)    per-channel filter taps
    b_ref   : (TC, 1, 1)           per-channel bias
    o_ref   : (1, TC, OH, OW)      output block
    pad_ref : (TC, Hp, Wp) f32     VMEM scratch holding the zero-padded tile
    """
    tc = o_ref.shape[1]

    # --- Zero-pad inside VMEM (replaces the wrapper jnp.pad HBM pass). -----
    # Full memset each step keeps the kernel stateless across grid iterations
    # (safe under megacore "parallel" scheduling); interior is then overwritten.
    if padding > 0:
        pad_ref[...] = jnp.zeros_like(pad_ref)
    pad_ref[:, padding:padding + in_h, padding:padding + in_w] = (
        x_ref[0].astype(jnp.float32))

    # --- Hoisted parameter loads: one load + cast, indexed per tap below. ---
    w_all = w_ref[...].astype(jnp.float32)            # (TC, KT, 1, 1)
    # Bias folded into the accumulator init (single broadcast, no final add).
    acc = jnp.broadcast_to(b_ref[...].astype(jnp.float32), (tc, out_h, out_w))

    # --- Unrolled tap loop: each tap reads its shifted window straight from
    # the padded VMEM ref and multiplies by that tap's per-channel scalar.
    # Accumulate in f32 vregs; store the output exactly once at the end.
    # (MXU deliberately unused: depthwise conv is a VPU/HBM workload.)
    for kh in range(kh_size):
        for kw in range(kw_size):
            t = kh * kw_size + kw
            if stride == 1:
                win = pad_ref[:, kh:kh + out_h, kw:kw + out_w]
            else:
                # stride > 1: decimate at the ref level, not on a loaded array.
                win = pad_ref[:, pl.ds(kh, out_h, stride=stride),
                              pl.ds(kw, out_w, stride=stride)]
            acc = acc + win * w_all[:, t]

    o_ref[0, :, :, :] = acc.astype(o_ref.dtype)


def _pick_channel_tile(c):
    # Full-C block when C is small (also satisfies the BlockSpec
    # "block == full dim" exemption); otherwise sublane-aligned 8-channel
    # tiles bound per-step VMEM and create enough parallel grid blocks.
    if c <= 8 or c % 8 != 0:
        return c
    return 8


def depthwise_conv2d(x_nchw, weight, bias, *, stride=1, padding=0):
    """Depthwise conv2d matching nn.Conv2d(C, C, K, stride, padding, groups=C).

    x_nchw : (N, C, H, W)
    weight : (C, 1, KH, KW)   (PyTorch depthwise weight layout)
    bias   : (C,)
    returns: (N, C, OH, OW)
    """
    n, c, h, w = x_nchw.shape
    kh, kw = weight.shape[2], weight.shape[3]
    kt = kh * kw
    oh = (h + 2 * padding - kh) // stride + 1
    ow = (w + 2 * padding - kw) // stride + 1
    hp = h + 2 * padding
    wp = w + 2 * padding

    tc = _pick_channel_tile(c)
    c_tiles = c // tc

    # Tiny parameter reshapes done once in the wrapper so the kernel needs no
    # in-kernel reshapes: channel on the leading dim, trailing (1, 1) dims
    # broadcast cleanly against (TC, OH, OW) tiles.
    w_k = weight.reshape(c, kt)[:, :, None, None]      # (C, KT, 1, 1)
    b_k = bias.reshape(c, 1, 1)                        # (C, 1, 1)

    kernel = functools.partial(
        _dwconv_kernel, kh_size=kh, kw_size=kw, stride=stride,
        padding=padding, in_h=h, in_w=w, out_h=oh, out_w=ow)

    # Rough per-step VMEM footprint: double-buffered in/out blocks + scratch.
    # Only raise the scoped-VMEM limit when a block is actually large, staying
    # below v7x's 64 MiB physical VMEM.  For very large frames, add an OH-row
    # tiling axis (with a KH-1 halo) instead of raising this further.
    itemsize = jnp.dtype(x_nchw.dtype).itemsize
    block_bytes = (2 * tc * h * w * itemsize + 2 * tc * oh * ow * itemsize
                   + tc * hp * wp * 4)
    compiler_kwargs = {}
    if block_bytes > 24 * 2 ** 20:
        compiler_kwargs["vmem_limit_bytes"] = int(
            min(60 * 2 ** 20, 2 * block_bytes))

    out = pl.pallas_call(
        kernel,
        out_shape=jax.ShapeDtypeStruct((n, c, oh, ow), x_nchw.dtype),
        grid_spec=pltpu.PrefetchScalarGridSpec(
            num_scalar_prefetch=0,
            # Channel tiles outer, batch inner: weight/bias blocks only change
            # when the channel tile changes.
            grid=(c_tiles, n),
            in_specs=[
                pl.BlockSpec((1, tc, h, w), lambda ci, b: (b, ci, 0, 0)),
                pl.BlockSpec((tc, kt, 1, 1), lambda ci, b: (ci, 0, 0, 0)),
                pl.BlockSpec((tc, 1, 1), lambda ci, b: (ci, 0, 0)),
            ],
            out_specs=pl.BlockSpec((1, tc, oh, ow),
                                   lambda ci, b: (b, ci, 0, 0)),
            scratch_shapes=[pltpu.VMEM((tc, hp, wp), jnp.float32)],
        ),
        compiler_params=pltpu.CompilerParams(
            dimension_semantics=("parallel", "parallel"),
            **compiler_kwargs),
    )(x_nchw, w_k, b_k)

    return out


def _reference(x_nchw, weight, bias, *, stride, padding):
    # Pure-JAX reference (grouped conv) for correctness checking.
    c = x_nchw.shape[1]
    out = jax.lax.conv_general_dilated(
        x_nchw, weight,
        window_strides=(stride, stride),
        padding=[(padding, padding), (padding, padding)],
        dimension_numbers=("NCHW", "OIHW", "NCHW"),
        feature_group_count=c)
    return out + bias[None, :, None, None]


if __name__ == "__main__":
    # Module config: DepthwiseConv2d(in_channels=4, kernel_size=3, stride=1, padding=1)
    N, C, H, W = 2, 4, 16, 16
    K, STRIDE, PAD = 3, 1, 1

    key = jax.random.PRNGKey(0)
    kx, kw_, kb = jax.random.split(key, 3)

    x = jax.random.normal(kx, (N, C, H, W), dtype=jnp.float32)
    # Deterministic parameter init (synthetic, matching nn.Conv2d param shapes
    # for groups=in_channels: weight (C, 1, K, K), bias (C,)).
    fan_in = 1 * K * K
    bound = 1.0 / (fan_in ** 0.5)
    weight = jax.random.uniform(kw_, (C, 1, K, K), jnp.float32, -bound, bound)
    bias = jax.random.uniform(kb, (C,), jnp.float32, -bound, bound)

    out = depthwise_conv2d(x, weight, bias, stride=STRIDE, padding=PAD)
    out = jax.block_until_ready(out)

    ref = _reference(x, weight, bias, stride=STRIDE, padding=PAD)
    assert out.shape == ref.shape
    assert jnp.max(jnp.abs(out - ref)) < 1e-4

    print("KERNEL_OK")
</pallas_src>

<mosaic_0001>
module attributes {stable_mosaic.version = 11 : i64} {
  func.func @_dwconv_kernel(%arg0: i32, %arg1: i32, %arg2: memref<1x4x16x16xf32, #tpu.memory_space<vmem>>, %arg3: memref<4x9x1x1xf32, #tpu.memory_space<vmem>>, %arg4: memref<4x1x1xf32, #tpu.memory_space<vmem>>, %arg5: memref<1x4x16x16xf32, #tpu.memory_space<vmem>>, %arg6: memref<4x18x18xf32, #tpu.memory_space<vmem>>) attributes {dimension_semantics = [#tpu.dimension_semantics<parallel>, #tpu.dimension_semantics<parallel>], iteration_bounds = array<i64: 1, 2>, scalar_prefetch = 0 : i64, scratch_operands = 1 : i64, tpu.core_type = #tpu.core_type<tc>, window_params = [{transform_indices = @transform_0, window_bounds = array<i64: 1, 4, 16, 16>}, {transform_indices = @transform_1, window_bounds = array<i64: 4, 9, 1, 1>}, {transform_indices = @transform_2, window_bounds = array<i64: 4, 1, 1>}, {transform_indices = @transform_3, window_bounds = array<i64: 1, 4, 16, 16>}]} {
    %cst = arith.constant 0.000000e+00 : f32
    %0 = vector.broadcast %cst : f32 to vector<4x18x18xf32>
    %c0 = arith.constant 0 : index
    %c0_0 = arith.constant 0 : index
    %c0_1 = arith.constant 0 : index
    %1 = vector.load %arg6[%c0, %c0_0, %c0_1] : memref<4x18x18xf32, #tpu.memory_space<vmem>>, vector<4x18x18xf32>
    tpu.vector_store %arg6[%c0, %c0_0, %c0_1], %0 {strides = array<i32>} : memref<4x18x18xf32, #tpu.memory_space<vmem>>, vector<4x18x18xf32>,
    %c0_2 = arith.constant 0 : index
    %c0_3 = arith.constant 0 : index
    %c0_4 = arith.constant 0 : index
    %c0_5 = arith.constant 0 : index
    %2 = vector.load %arg2[%c0_2, %c0_3, %c0_4, %c0_5] : memref<1x4x16x16xf32, #tpu.memory_space<vmem>>, vector<1x4x16x16xf32>
    %3 = vector.shape_cast %2 : vector<1x4x16x16xf32> to vector<4x16x16xf32>
    %c0_6 = arith.constant 0 : index
    %c1 = arith.constant 1 : index
    %c1_7 = arith.constant 1 : index
    %4 = vector.load %arg6[%c0_6, %c1, %c1_7] : memref<4x18x18xf32, #tpu.memory_space<vmem>>, vector<4x16x16xf32>
    tpu.vector_store %arg6[%c0_6, %c1, %c1_7], %3 {strides = array<i32>} : memref<4x18x18xf32, #tpu.memory_space<vmem>>, vector<4x16x16xf32>,
    %c0_8 = arith.constant 0 : index
    %c0_9 = arith.constant 0 : index
    %c0_10 = arith.constant 0 : index
    %c0_11 = arith.constant 0 : index
    %5 = vector.load %arg3[%c0_8, %c0_9, %c0_10, %c0_11] : memref<4x9x1x1xf32, #tpu.memory_space<vmem>>, vector<4x9x1x1xf32>
    %c0_12 = arith.constant 0 : index
    %c0_13 = arith.constant 0 : index
    %c0_14 = arith.constant 0 : index
    %6 = vector.load %arg4[%c0_12, %c0_13, %c0_14] : memref<4x1x1xf32, #tpu.memory_space<vmem>>, vector<4x1x1xf32>
    %7 = vector.shape_cast %6 : vector<4x1x1xf32> to vector<4x1x1xf32>
    %8 = vector.broadcast %7 : vector<4x1x1xf32> to vector<4x16x16xf32>
    %c0_15 = arith.constant 0 : index
    %c0_16 = arith.constant 0 : index
    %c0_17 = arith.constant 0 : index
    %9 = vector.load %arg6[%c0_15, %c0_16, %c0_17] : memref<4x18x18xf32, #tpu.memory_space<vmem>>, vector<4x16x16xf32>
    %10 = vector.extract_strided_slice %5 {offsets = [0, 0, 0, 0], sizes = [4, 1, 1, 1], strides = [1, 1, 1, 1]} : vector<4x9x1x1xf32> to vector<4x1x1x1xf32>
    %11 = vector.shape_cast %10 : vector<4x1x1x1xf32> to vector<4x1x1xf32>
    %12 = vector.broadcast %11 : vector<4x1x1xf32> to vector<4x16x16xf32>
    %13 = arith.mulf %9, %12 : vector<4x16x16xf32>
    %14 = arith.addf %8, %13 : vector<4x16x16xf32>
    %c0_18 = arith.constant 0 : index
    %c0_19 = arith.constant 0 : index
    %c1_20 = arith.constant 1 : index
    %15 = vector.load %arg6[%c0_18, %c0_19, %c1_20] : memref<4x18x18xf32, #tpu.memory_space<vmem>>, vector<4x16x16xf32>
    %16 = vector.extract_strided_slice %5 {offsets = [0, 1, 0, 0], sizes = [4, 1, 1, 1], strides = [1, 1, 1, 1]} : vector<4x9x1x1xf32> to vector<4x1x1x1xf32>
    %17 = vector.shape_cast %16 : vector<4x1x1x1xf32> to vector<4x1x1xf32>
    %18 = vector.broadcast %17 : vector<4x1x1xf32> to vector<4x16x16xf32>
    %19 = arith.mulf %15, %18 : vector<4x16x16xf32>
    %20 = arith.addf %14, %19 : vector<4x16x16xf32>
    %c0_21 = arith.constant 0 : index
    %c0_22 = arith.constant 0 : index
    %c2 = arith.constant 2 : index
    %21 = vector.load %arg6[%c0_21, %c0_22, %c2] : memref<4x18x18xf32, #tpu.memory_space<vmem>>, vector<4x16x16xf32>
    %22 = vector.extract_strided_slice %5 {offsets = [0, 2, 0, 0], sizes = [4, 1, 1, 1], strides = [1, 1, 1, 1]} : vector<4x9x1x1xf32> to vector<4x1x1x1xf32>
    %23 = vector.shape_cast %22 : vector<4x1x1x1xf32> to vector<4x1x1xf32>
    %24 = vector.broadcast %23 : vector<4x1x1xf32> to vector<4x16x16xf32>
    %25 = arith.mulf %21, %24 : vector<4x16x16xf32>
    %26 = arith.addf %20, %25 : vector<4x16x16xf32>
    %c0_23 = arith.constant 0 : index
    %c1_24 = arith.constant 1 : index
    %c0_25 = arith.constant 0 : index
    %27 = vector.load %arg6[%c0_23, %c1_24, %c0_25] : memref<4x18x18xf32, #tpu.memory_space<vmem>>, vector<4x16x16xf32>
    %28 = vector.extract_strided_slice %5 {offsets = [0, 3, 0, 0], sizes = [4, 1, 1, 1], strides = [1, 1, 1, 1]} : vector<4x9x1x1xf32> to vector<4x1x1x1xf32>
    %29 = vector.shape_cast %28 : vector<4x1x1x1xf32> to vector<4x1x1xf32>
    %30 = vector.broadcast %29 : vector<4x1x1xf32> to vector<4x16x16xf32>
    %31 = arith.mulf %27, %30 : vector<4x16x16xf32>
    %32 = arith.addf %26, %31 : vector<4x16x16xf32>
    %c0_26 = arith.constant 0 : index
    %c1_27 = arith.constant 1 : index
    %c1_28 = arith.constant 1 : index
    %33 = vector.load %arg6[%c0_26, %c1_27, %c1_28] : memref<4x18x18xf32, #tpu.memory_space<vmem>>, vector<4x16x16xf32>
    %34 = vector.extract_strided_slice %5 {offsets = [0, 4, 0, 0], sizes = [4, 1, 1, 1], strides = [1, 1, 1, 1]} : vector<4x9x1x1xf32> to vector<4x1x1x1xf32>
    %35 = vector.shape_cast %34 : vector<4x1x1x1xf32> to vector<4x1x1xf32>
    %36 = vector.broadcast %35 : vector<4x1x1xf32> to vector<4x16x16xf32>
    %37 = arith.mulf %33, %36 : vector<4x16x16xf32>
    %38 = arith.addf %32, %37 : vector<4x16x16xf32>
    %c0_29 = arith.constant 0 : index
    %c1_30 = arith.constant 1 : index
    %c2_31 = arith.constant 2 : index
    %39 = vector.load %arg6[%c0_29, %c1_30, %c2_31] : memref<4x18x18xf32, #tpu.memory_space<vmem>>, vector<4x16x16xf32>
    %40 = vector.extract_strided_slice %5 {offsets = [0, 5, 0, 0], sizes = [4, 1, 1, 1], strides = [1, 1, 1, 1]} : vector<4x9x1x1xf32> to vector<4x1x1x1xf32>
    %41 = vector.shape_cast %40 : vector<4x1x1x1xf32> to vector<4x1x1xf32>
    %42 = vector.broadcast %41 : vector<4x1x1xf32> to vector<4x16x16xf32>
    %43 = arith.mulf %39, %42 : vector<4x16x16xf32>
    %44 = arith.addf %38, %43 : vector<4x16x16xf32>
    %c0_32 = arith.constant 0 : index
    %c2_33 = arith.constant 2 : index
    %c0_34 = arith.constant 0 : index
    %45 = vector.load %arg6[%c0_32, %c2_33, %c0_34] : memref<4x18x18xf32, #tpu.memory_space<vmem>>, vector<4x16x16xf32>
    %46 = vector.extract_strided_slice %5 {offsets = [0, 6, 0, 0], sizes = [4, 1, 1, 1], strides = [1, 1, 1, 1]} : vector<4x9x1x1xf32> to vector<4x1x1x1xf32>
    %47 = vector.shape_cast %46 : vector<4x1x1x1xf32> to vector<4x1x1xf32>
    %48 = vector.broadcast %47 : vector<4x1x1xf32> to vector<4x16x16xf32>
    %49 = arith.mulf %45, %48 : vector<4x16x16xf32>
    %50 = arith.addf %44, %49 : vector<4x16x16xf32>
    %c0_35 = arith.constant 0 : index
    %c2_36 = arith.constant 2 : index
    %c1_37 = arith.constant 1 : index
    %51 = vector.load %arg6[%c0_35, %c2_36, %c1_37] : memref<4x18x18xf32, #tpu.memory_space<vmem>>, vector<4x16x16xf32>
    %52 = vector.extract_strided_slice %5 {offsets = [0, 7, 0, 0], sizes = [4, 1, 1, 1], strides = [1, 1, 1, 1]} : vector<4x9x1x1xf32> to vector<4x1x1x1xf32>
    %53 = vector.shape_cast %52 : vector<4x1x1x1xf32> to vector<4x1x1xf32>
    %54 = vector.broadcast %53 : vector<4x1x1xf32> to vector<4x16x16xf32>
    %55 = arith.mulf %51, %54 : vector<4x16x16xf32>
    %56 = arith.addf %50, %55 : vector<4x16x16xf32>
    %c0_38 = arith.constant 0 : index
    %c2_39 = arith.constant 2 : index
    %c2_40 = arith.constant 2 : index
    %57 = vector.load %arg6[%c0_38, %c2_39, %c2_40] : memref<4x18x18xf32, #tpu.memory_space<vmem>>, vector<4x16x16xf32>
    %58 = vector.extract_strided_slice %5 {offsets = [0, 8, 0, 0], sizes = [4, 1, 1, 1], strides = [1, 1, 1, 1]} : vector<4x9x1x1xf32> to vector<4x1x1x1xf32>
    %59 = vector.shape_cast %58 : vector<4x1x1x1xf32> to vector<4x1x1xf32>
    %60 = vector.broadcast %59 : vector<4x1x1xf32> to vector<4x16x16xf32>
    %61 = arith.mulf %57, %60 : vector<4x16x16xf32>
    %62 = arith.addf %56, %61 : vector<4x16x16xf32>
    %c0_41 = arith.constant 0 : index
    %c0_42 = arith.constant 0 : index
    %c0_43 = arith.constant 0 : index
    %c0_44 = arith.constant 0 : index
    %63 = vector.load %arg5[%c0_41, %c0_42, %c0_43, %c0_44] : memref<1x4x16x16xf32, #tpu.memory_space<vmem>>, vector<1x4x16x16xf32>
    %64 = vector.shape_cast %63 : vector<1x4x16x16xf32> to vector<4x16x16xf32>
    %65 = vector.shape_cast %62 : vector<4x16x16xf32> to vector<1x4x16x16xf32>
    tpu.vector_store %arg5[%c0_41, %c0_42, %c0_43, %c0_44], %65 {strides = array<i32>} : memref<1x4x16x16xf32, #tpu.memory_space<vmem>>, vector<1x4x16x16xf32>,
    return
  }
  func.func @transform_0(%arg0: i32, %arg1: i32) -> (i32, i32, i32, i32) {
    %c0_i32 = arith.constant 0 : i32
    %c0_i32_0 = arith.constant 0 : i32
    %c0_i32_1 = arith.constant 0 : i32
    return %arg1, %arg0, %c0_i32, %c0_i32_0 : i32, i32, i32, i32
  }
  func.func @transform_1(%arg0: i32, %arg1: i32) -> (i32, i32, i32, i32) {
    %c0_i32 = arith.constant 0 : i32
    %c0_i32_0 = arith.constant 0 : i32
    %c0_i32_1 = arith.constant 0 : i32
    %c0_i32_2 = arith.constant 0 : i32
    return %arg0, %c0_i32, %c0_i32_0, %c0_i32_1 : i32, i32, i32, i32
  }
  func.func @transform_2(%arg0: i32, %arg1: i32) -> (i32, i32, i32) {
    %c0_i32 = arith.constant 0 : i32
    %c0_i32_0 = arith.constant 0 : i32
    %c0_i32_1 = arith.constant 0 : i32
    return %arg0, %c0_i32, %c0_i32_0 : i32, i32, i32
  }
  func.func @transform_3(%arg0: i32, %arg1: i32) -> (i32, i32, i32, i32) {
    %c0_i32 = arith.constant 0 : i32
    %c0_i32_0 = arith.constant 0 : i32
    %c0_i32_1 = arith.constant 0 : i32
    return %arg1, %arg0, %c0_i32, %c0_i32_0 : i32, i32, i32, i32
  }
}

</mosaic_0001>

<llo_original>
// kernel: tpu_custom_call.1
$region0: #{tpu_custom_call.1}
  #allocation0 [shape = 'u32[]', space=smem, size = 0x4, offset = 0x4, fixed_abs, tag = 'smem constant byte address 0x4 - core index']
  #allocation1 [shape = 'u32[144,128]{1,0:T(1,128)}', space=vmem, size = 0x12000, scoped, tag = 'internal scratch']
  #allocation2 [shape = 'f32[4,18,18]{2,1,0:T(8,128)}', space=vmem, size = 0xc000, scoped, tag = 'scratch operand']
  %s0 = inlined_call_operand.hbm [shape: f32[2,4,16,16], index: 0, kind: input, shape index: {}]
  %s1 = inlined_call_operand.vmem [shape: f32[4,9,1,1], index: 1, kind: input, shape index: {}]
  %s2 = inlined_call_operand.vmem [shape: f32[4,1,1], index: 2, kind: input, shape index: {}]
  %s3 = inlined_call_operand.hbm [shape: f32[2,4,16,16], index: 3, kind: output, shape index: {}]
  %s4 = sld [smem:[#allocation0]]
  $region49: #{tpu_custom_call.1} parent=0
    _
  %s6 = ssub.s32 1, %s4
  %s7 = scalar_select 0, %s6, %s4
  $region1: #{tpu_custom_call.1} parent=0
    #allocation3 [shape = 'u8[65536]{0}', space=vmem, size = 0x10000, scoped, tag = 'input window, operand 0']
    #allocation4 [shape = 's32[2]{0}', space=sflag, size = 0x8, scoped, tag = 'scoped memory for tpu_custom_call.1']
    #allocation5 [shape = 's32[2]{0}', space=sflag, size = 0x8, scoped, tag = 'scoped memory for tpu_custom_call.1']
    #allocation6 [shape = 'u8[65536]{0}', space=vmem, size = 0x10000, scoped, tag = 'output window, operand 0']
    %8 = vsyncpa [#allocation4], 0
    %s9 = scalar_lea.sflag [#allocation4], 1
    %10 = vsyncpa %s9, 0
    %11 = vsyncpa [#allocation5], 0
    %s12 = scalar_lea.sflag [#allocation5], 1
    %13 = vsyncpa %s12, 0
    loop: start=0, step=1, limit=4
    $region2: #{tpu_custom_call.1} parent=1 // loop_pre_header
      _
    $region3: #{tpu_custom_call.1} parent=1 // loop_header
      %s15 = sphi 0, %s19
      %p16 = scmp.ge.s32.totalorder %s15, 4
      %s22 = sphi 0, %s34
      %s23 = sphi 0, %s30
      %s24 = sphi 0, %s22
      %s25 = sphi 0, %s23
      %s26 = sphi 0, %s24
      %s27 = sphi 0, %s25
      %s39 = sphi 0, %s41
      %s42 = sphi 0, %s39
      %s43 = sphi 0, %s42
      %s59 = sphi 0, %s43
      %s65 = sphi 0, %s67
      %s68 = sphi 0, %s65
      %s69 = sphi 0, %s68
      %s85 = sphi 0, %s69
      %s91 = sphi 0, %s93
      %s94 = sphi 0, %s91
      %s95 = sphi 0, %s94
      %s111 = sphi 0, %s95
      %s119 = sphi 0, %s121
      %s122 = sphi 0, %s119
      %s123 = sphi 0, %s122
      %s139 = sphi 0, %s123
    $region4: #{tpu_custom_call.1} parent=1 // loop_header_branch
      %18 = sbr.rel (%p16) target = $region8
    $region5: #{tpu_custom_call.1} parent=1 // loop_body
      %s20 = ssub.s32 %s15, 1
      %s21 = ssub.s32 %s15, 2
      %s28 = sadd.s32 1, %s23
      %p29 = scmp.ge.s32.totalorder %s28, 2
      %s30 = scalar_select %p29, 0, %s28
      %s31 = sadd.s32 1, %s22
      %s32 = scalar_select %p29, %s31, %s22
      %p33 = scmp.ge.s32.totalorder %s32, 1
      %s34 = scalar_select %p33, 0, %s32
      %s35 = ssub.s32 %s23, %s30
      %s36 = ssub.s32 %s22, %s34
      %s37 = sor.u32 %s35, %s36
      %p38 = scmp.eq.s32.totalorder %s37, 0
      %s40 = sadd.s32 %s39, 1
      %s41 = scalar_select %p38, %s39, %s40
      %p44 = pneg %p38
      %p45 = scmp.eq.s32.totalorder %s15, 1
      %p46 = por %p44, %p45
      %p47 = scmp.ne.s32.totalorder %s39, %s42
      %p48 = scmp.eq.s32.totalorder %s15, 0
      %p49 = por %p47, %p48
      %p50 = scmp.ne.s32.totalorder %s39, %s42
      %p51 = scmp.eq.s32.totalorder %s20, 1
      %p52 = por %p50, %p51
      %p53 = scmp.ne.s32.totalorder %s42, %s43
      %p54 = scmp.eq.s32.totalorder %s20, 0
      %p55 = por %p53, %p54
      %p56 = scmp.ne.s32.totalorder %s42, %s43
      %p57 = scmp.eq.s32.totalorder %s21, 1
      %p58 = por %p56, %p57
      %p60 = scmp.ne.s32.totalorder %s43, %s59
      %p61 = scmp.eq.s32.totalorder %s21, 0
      %p62 = por %p60, %p61
      %s63 = ssub.s32 %s22, %s34
      %p64 = scmp.eq.s32.totalorder %s63, 0
      %s66 = sadd.s32 %s65, 1
      %s67 = scalar_select %p64, %s65, %s66
      %p70 = pneg %p64
      %p71 = scmp.eq.s32.totalorder %s15, 1
      %p72 = por %p70, %p71
      %p73 = scmp.ne.s32.totalorder %s65, %s68
      %p74 = scmp.eq.s32.totalorder %s15, 0
      %p75 = por %p73, %p74
      %p76 = scmp.ne.s32.totalorder %s65, %s68
      %p77 = scmp.eq.s32.totalorder %s20, 1
      %p78 = por %p76, %p77
      %p79 = scmp.ne.s32.totalorder %s68, %s69
      %p80 = scmp.eq.s32.totalorder %s20, 0
      %p81 = por %p79, %p80
      %p82 = scmp.ne.s32.totalorder %s68, %s69
      %p83 = scmp.eq.s32.totalorder %s21, 1
      %p84 = por %p82, %p83
      %p86 = scmp.ne.s32.totalorder %s69, %s85
      %p87 = scmp.eq.s32.totalorder %s21, 0
      %p88 = por %p86, %p87
      %s89 = ssub.s32 %s22, %s34
      %p90 = scmp.eq.s32.totalorder %s89, 0
      %s92 = sadd.s32 %s91, 1
      %s93 = scalar_select %p90, %s91, %s92
      %p96 = pneg %p90
      %p97 = scmp.eq.s32.totalorder %s15, 1
      %p98 = por %p96, %p97
      %p99 = scmp.ne.s32.totalorder %s91, %s94
      %p100 = scmp.eq.s32.totalorder %s15, 0
      %p101 = por %p99, %p100
      %p102 = scmp.ne.s32.totalorder %s91, %s94
      %p103 = scmp.eq.s32.totalorder %s20, 1
      %p104 = por %p102, %p103
      %p105 = scmp.ne.s32.totalorder %s94, %s95
      %p106 = scmp.eq.s32.totalorder %s20, 0
      %p107 = por %p105, %p106
      %p108 = scmp.ne.s32.totalorder %s94, %s95
      %p109 = scmp.eq.s32.totalorder %s21, 1
      %p110 = por %p108, %p109
      %p112 = scmp.ne.s32.totalorder %s95, %s111
      %p113 = scmp.eq.s32.totalorder %s21, 0
      %p114 = por %p112, %p113
      %s115 = ssub.s32 %s23, %s30
      %s116 = ssub.s32 %s22, %s34
      %s117 = sor.u32 %s115, %s116
      %p118 = scmp.eq.s32.totalorder %s117, 0
      %s120 = sadd.s32 %s119, 1
      %s121 = scalar_select %p118, %s119, %s120
      %p124 = pneg %p118
      %p125 = scmp.eq.s32.totalorder %s15, 1
      %p126 = por %p124, %p125
      %p127 = scmp.ne.s32.totalorder %s119, %s122
      %p128 = scmp.eq.s32.totalorder %s15, 0
      %p129 = por %p127, %p128
      %p130 = scmp.ne.s32.totalorder %s119, %s122
      %p131 = scmp.eq.s32.totalorder %s20, 1
      %p132 = por %p130, %p131
      %p133 = scmp.ne.s32.totalorder %s122, %s123
      %p134 = scmp.eq.s32.totalorder %s20, 0
      %p135 = por %p133, %p134
      %p136 = scmp.ne.s32.totalorder %s122, %s123
      %p137 = scmp.eq.s32.totalorder %s21, 1
      %p138 = por %p136, %p137
      %p140 = scmp.ne.s32.totalorder %s123, %s139
      %p141 = scmp.eq.s32.totalorder %s21, 0
      %p142 = por %p140, %p141
      %p143 = scmp.le.s32.totalorder 1, %s15
      %p144 = scmp.lt.s32.totalorder %s15, 3
      %p145 = pnand %p143, %p144
      %p146 = pneg %p145
      // Predicated region
      $region9: #{tpu_custom_call.1} parent=5 // pred_check
        _
      $region10: #{tpu_custom_call.1} parent=5 // pred_check_branch
        %148 = sbr.rel (%p145) target = $region12
      $region11: #{tpu_custom_call.1} parent=5 // pred_region
        %s149 = ssub.s32 %s15, 1
        // Predicated region
        $region13: #{tpu_custom_call.1} parent=11 // pred_check
          %p150 = pneg %p81
        $region14: #{tpu_custom_call.1} parent=11 // pred_check_branch
          %152 = sbr.rel (%p150) target = $region16
        $region15: #{tpu_custom_call.1} parent=11 // pred_region
          %s153 = smul.u32 4, %s24
          %p154 = scmp.lt.s32.totalorder %s153, 3
          %s155 = scalar_select %p154, %s153, 3
          %s156 = smul.addr %s155, 9
          %s157 = scalar_lea.vmem %s1, %s156
          %s158 = smul.u32 4, %s24
        $region16: #{tpu_custom_call.1} parent=11 // pred_fallthru
          _
        // Predicated region
        $region17: #{tpu_custom_call.1} parent=11 // pred_check
          %p159 = pneg %p107
        $region18: #{tpu_custom_call.1} parent=11 // pred_check_branch
          %161 = sbr.rel (%p159) target = $region20
        $region19: #{tpu_custom_call.1} parent=11 // pred_region
          %s162 = smul.u32 4, %s24
          %p163 = scmp.lt.s32.totalorder %s162, 3
          %s164 = scalar_select %p163, %s162, 3
          %s165 = scalar_lea.vmem %s2, %s164
          %s166 = smul.u32 4, %s24
        $region20: #{tpu_custom_call.1} parent=11 // pred_fallthru
          _
      $region12: #{tpu_custom_call.1} parent=5 // pred_fallthru
        _
      %p167 = scmp.lt.s32.totalorder %s15, 2
      // Predicated region
      $region21: #{tpu_custom_call.1} parent=5 // pred_check
        %p168 = pneg %p167
      $region22: #{tpu_custom_call.1} parent=5 // pred_check_branch
        %170 = sbr.rel (%p168) target = $region24
      $region23: #{tpu_custom_call.1} parent=5 // pred_region
        // Predicated region
        $region25: #{tpu_custom_call.1} parent=23 // pred_check
          %p171 = pneg %p49
        $region26: #{tpu_custom_call.1} parent=23 // pred_check_branch
          %173 = sbr.rel (%p171) target = $region28
        $region27: #{tpu_custom_call.1} parent=23 // pred_region
          %s174 = sand.u32 %s39, 1
          %s175 = scalar_lea.sflag [#allocation4], %s174
          %s176 = sand.u32 %s39, 1
          %s177 = smul.addr %s176, 64
          %s178 = scalar_lea.vmem [#allocation3], %s177
          %s179 = smul.u32 4, %s22
          %s181 = ssub.s32 1024, 1024
          %182 = vsyncadd %s175, %s181
          %s183 = smul.addr %s179, 2
          %s184 = smul.addr %s23, 8
          %s185 = sadd.s32 %s183, %s184
          %s186 = smul.addr %s185, 128
          %s187 = scalar_lea.hbm %s0, %s186
          %s188 = sshll.u32 %s178, 4
          %s189 = int_to_ptr.vmem [resolvable:$true] %s188
          %194 = dma.hbm_to_vmem [thread:$0]  %s187, 1024, %s189, %s175, 128, 128, 8
        $region28: #{tpu_custom_call.1} parent=23 // pred_fallthru
          _
      $region24: #{tpu_custom_call.1} parent=5 // pred_fallthru
        _
      %p195 = scmp.le.s32.totalorder 1, %s15
      %p196 = scmp.lt.s32.totalorder %s15, 3
      %p197 = pnand %p195, %p196
      %p198 = pneg %p197
      // Predicated region
      $region29: #{tpu_custom_call.1} parent=5 // pred_check
        _
      $region30: #{tpu_custom_call.1} parent=5 // pred_check_branch
        %200 = sbr.rel (%p197) target = $region32
      $region31: #{tpu_custom_call.1} parent=5 // pred_region
        %s201 = ssub.s32 %s15, 1
        %s202 = sand.u32 %s42, 1
        %s203 = scalar_lea.sflag [#allocation4], %s202
        %s204 = sand.u32 %s42, 1
        %s205 = smul.addr %s204, 64
        %s206 = scalar_lea.vmem [#allocation3], %s205
        // Predicated region
        $region33: #{tpu_custom_call.1} parent=31 // pred_check
          %p207 = pneg %p55
        $region34: #{tpu_custom_call.1} parent=31 // pred_check_branch
          %209 = sbr.rel (%p207) target = $region36
        $region35: #{tpu_custom_call.1} parent=31 // pred_region
          %210 = dma.done %s203, 1024
        $region36: #{tpu_custom_call.1} parent=31 // pred_fallthru
          _
        %s211 = sand.u32 %s42, 1
        %s212 = scalar_lea.sflag [#allocation4], %s211
        %s213 = sand.u32 %s42, 1
        %s214 = smul.addr %s213, 64
        %s215 = scalar_lea.vmem [#allocation3], %s214
        %p216 = pneg %p55
        %p217 = pneg %p52
        %s218 = smul.u32 4, %s24
        %p219 = scmp.lt.s32.totalorder %s218, 3
        %s220 = scalar_select %p219, %s218, 3
        %s221 = smul.addr %s220, 9
        %s222 = scalar_lea.vmem %s1, %s221
        %p223 = pneg %p81
        %p224 = pneg %p78
        %s225 = smul.u32 4, %s24
        %p226 = scmp.lt.s32.totalorder %s225, 3
        %s227 = scalar_select %p226, %s225, 3
        %s228 = scalar_lea.vmem %s2, %s227
        %p229 = pneg %p107
        %p230 = pneg %p104
        %p231 = pneg %p135
        %p232 = pneg %p132
        %s233 = sand.u32 %s122, 1
        %s234 = scalar_lea.sflag [#allocation5], %s233
        %s235 = sand.u32 %s122, 1
        %s236 = smul.addr %s235, 64
        %s237 = scalar_lea.vmem [#allocation6], %s236
        %s238 = smul.u32 4, %s24
        %s239 = smul.u32 4, %s24
        %p240 = scmp.lt.s32.totalorder %s239, 3
        %s241 = scalar_select %p240, %s239, 3
        %s242 = smul.addr %s241, 9
        %s243 = scalar_lea.vmem %s1, %s242
        %s244 = smul.u32 4, %s24
        %s245 = smul.u32 4, %s24
        %p246 = scmp.lt.s32.totalorder %s245, 3
        %s247 = scalar_select %p246, %s245, 3
        %s248 = scalar_lea.vmem %s2, %s247
        %s249 = smul.u32 4, %s24
        %s250 = smul.u32 4, %s24
        %vm251 = vcmask 146432
        %252 = vst.msk [vmem:[#allocation2] sm:$0xff] %vm251, 0.0
        %253 = vst.msk [vmem:[#allocation2 + $0x8] sm:$0xff] %vm251, 0.0
        %vm254 = vcmask 140288
        %255 = vst.msk [vmem:[#allocation2 + $0x10] sm:$0x3] %vm254, 0.0
        %256 = vst.msk [vmem:[#allocation2 + $0x18] sm:$0xff] %vm251, 0.0
        %257 = vst.msk [vmem:[#allocation2 + $0x20] sm:$0xff] %vm251, 0.0
        %258 = vst.msk [vmem:[#allocation2 + $0x28] sm:$0x3] %vm254, 0.0
        %259 = vst.msk [vmem:[#allocation2 + $0x30] sm:$0xff] %vm251, 0.0
        %260 = vst.msk [vmem:[#allocation2 + $0x38] sm:$0xff] %vm251, 0.0
        %261 = vst.msk [vmem:[#allocation2 + $0x40] sm:$0x3] %vm254, 0.0
        %262 = vst.msk [vmem:[#allocation2 + $0x48] sm:$0xff] %vm251, 0.0
        %263 = vst.msk [vmem:[#allocation2 + $0x50] sm:$0xff] %vm251, 0.0
        %264 = vst.msk [vmem:[#allocation2 + $0x58] sm:$0x3] %vm254, 0.0
        %v265 = vld [vmem:[%s206] sm:$0xff]
        %v266 = vld [vmem:[%s206 + $0x8] sm:$0xff]
        %v267 = vld [vmem:[%s206 + $0x10] sm:$0xff]
        %v268 = vld [vmem:[%s206 + $0x18] sm:$0xff]
        %v269 = vld [vmem:[%s206 + $0x20] sm:$0xff]
        %v270 = vld [vmem:[%s206 + $0x28] sm:$0xff]
        %v271 = vld [vmem:[%s206 + $0x30] sm:$0xff]
        %v272 = vld [vmem:[%s206 + $0x38] sm:$0xff]
        %281 = vrot.lane.b32.xlu0 %v265, 1
        %v282 = vpop.permute.xlu0 %281
        %283 = vrot.lane.b32.xlu0 %v266, 1
        %v284 = vpop.permute.xlu0 %283
        %285 = vrot.lane.b32.xlu0 %v267, 1
        %v286 = vpop.permute.xlu0 %285
        %287 = vrot.lane.b32.xlu0 %v268, 1
        %v288 = vpop.permute.xlu0 %287
        %289 = vrot.lane.b32.xlu0 %v269, 1
        %v290 = vpop.permute.xlu0 %289
        %291 = vrot.lane.b32.xlu0 %v270, 1
        %v292 = vpop.permute.xlu0 %291
        %293 = vrot.lane.b32.xlu0 %v271, 1
        %v294 = vpop.permute.xlu0 %293
        %295 = vrot.lane.b32.xlu0 %v272, 1
        %v296 = vpop.permute.xlu0 %295
        %vm305 = vcmask 138248
        %306 = vst.msk [vmem:[#allocation2 + $0x1] sm:$0xff] %vm305, %v282
        %307 = vst.msk [vmem:[#allocation2 + $0x9] sm:$0xff] %vm305, %v284
        %308 = vst.msk [vmem:[#allocation2 + $0x19] sm:$0xff] %vm305, %v286
        %309 = vst.msk [vmem:[#allocation2 + $0x21] sm:$0xff] %vm305, %v288
        %310 = vst.msk [vmem:[#allocation2 + $0x31] sm:$0xff] %vm305, %v290
        %311 = vst.msk [vmem:[#allocation2 + $0x39] sm:$0xff] %vm305, %v292
        %312 = vst.msk [vmem:[#allocation2 + $0x49] sm:$0xff] %vm305, %v294
        %313 = vst.msk [vmem:[#allocation2 + $0x51] sm:$0xff] %vm305, %v296
        %v314 = vld [vmem:[%s243] sm:$0x1]
        %v315 = vld [vmem:[%s243 + $0x1] sm:$0x1]
        %v316 = vld [vmem:[%s243 + $0x2] sm:$0x1]
        %v317 = vld [vmem:[%s243 + $0x3] sm:$0x1]
        %v318 = vld [vmem:[%s243 + $0x4] sm:$0x1]
        %v319 = vld [vmem:[%s243 + $0x5] sm:$0x1]
        %v320 = vld [vmem:[%s243 + $0x6] sm:$0x1]
        %v321 = vld [vmem:[%s243 + $0x7] sm:$0x1]
        %v322 = vld [vmem:[%s243 + $0x8] sm:$0x1]
        %v323 = vld [vmem:[%s243 + $0x9] sm:$0x1]
        %v324 = vld [vmem:[%s243 + $0xa] sm:$0x1]
        %v325 = vld [vmem:[%s243 + $0xb] sm:$0x1]
        %v326 = vld [vmem:[%s243 + $0xc] sm:$0x1]
        %v327 = vld [vmem:[%s243 + $0xd] sm:$0x1]
        %v328 = vld [vmem:[%s243 + $0xe] sm:$0x1]
        %v329 = vld [vmem:[%s243 + $0xf] sm:$0x1]
        %v330 = vld [vmem:[%s243 + $0x10] sm:$0x1]
        %v331 = vld [vmem:[%s243 + $0x11] sm:$0x1]
        %v332 = vld [vmem:[%s243 + $0x12] sm:$0x1]
        %v333 = vld [vmem:[%s243 + $0x13] sm:$0x1]
        %v334 = vld [vmem:[%s243 + $0x14] sm:$0x1]
        %v335 = vld [vmem:[%s243 + $0x15] sm:$0x1]
        %v336 = vld [vmem:[%s243 + $0x16] sm:$0x1]
        %v337 = vld [vmem:[%s243 + $0x17] sm:$0x1]
        %v338 = vld [vmem:[%s243 + $0x18] sm:$0x1]
        %v339 = vld [vmem:[%s243 + $0x19] sm:$0x1]
        %v340 = vld [vmem:[%s243 + $0x1a] sm:$0x1]
        %v341 = vld [vmem:[%s243 + $0x1b] sm:$0x1]
        %v342 = vld [vmem:[%s243 + $0x1c] sm:$0x1]
        %v343 = vld [vmem:[%s243 + $0x1d] sm:$0x1]
        %v344 = vld [vmem:[%s243 + $0x1e] sm:$0x1]
        %v345 = vld [vmem:[%s243 + $0x1f] sm:$0x1]
        %v346 = vld [vmem:[%s243 + $0x20] sm:$0x1]
        %v347 = vld [vmem:[%s243 + $0x21] sm:$0x1]
        %v348 = vld [vmem:[%s243 + $0x22] sm:$0x1]
        %v349 = vld [vmem:[%s243 + $0x23] sm:$0x1]
        %v350 = vld [vmem:[%s248] sm:$0x1]
        %v351 = vld [vmem:[%s248 + $0x1] sm:$0x1]
        %v352 = vld [vmem:[%s248 + $0x2] sm:$0x1]
        %v353 = vld [vmem:[%s248 + $0x3] sm:$0x1]
        %v358 = vlaneseq
        %v359 = vshrl.u32 %v358, 7
        %v360 = vsub.s32 0, %v359
        %v361 = vrot.slane %v350, %v360
        %v362 = vlaneseq
        %v363 = vshrl.u32 %v362, 7
        %v364 = vsub.s32 0, %v363
        %v365 = vrot.slane %v351, %v364
        %v366 = vlaneseq
        %v367 = vshrl.u32 %v366, 7
        %v368 = vsub.s32 0, %v367
        %v369 = vrot.slane %v352, %v368
        %v370 = vlaneseq
        %v371 = vshrl.u32 %v370, 7
        %v372 = vsub.s32 0, %v371
        %v373 = vrot.slane %v353, %v372
        %374 = vset.pattern.permute.xlu0 0
        %375 = vperm.xlu0 %374, %v361
        %v376 = vpop.permute.xlu0 %375
        %378 = vset.pattern.permute.xlu0 0
        %379 = vperm.xlu0 %378, %v365
        %v380 = vpop.permute.xlu0 %379
        %382 = vset.pattern.permute.xlu0 0
        %383 = vperm.xlu0 %382, %v369
        %v384 = vpop.permute.xlu0 %383
        %386 = vset.pattern.permute.xlu0 0
        %387 = vperm.xlu0 %386, %v373
        %v388 = vpop.permute.xlu0 %387
        %v390 = vld [vmem:[#allocation2] sm:$0xff]
        %v391 = vld [vmem:[#allocation2 + $0x8] sm:$0xff]
        %v392 = vld [vmem:[#allocation2 + $0x18] sm:$0xff]
        %v393 = vld [vmem:[#allocation2 + $0x20] sm:$0xff]
        %v394 = vld [vmem:[#allocation2 + $0x30] sm:$0xff]
        %v395 = vld [vmem:[#allocation2 + $0x38] sm:$0xff]
        %v396 = vld [vmem:[#allocation2 + $0x48] sm:$0xff]
        %v397 = vld [vmem:[#allocation2 + $0x50] sm:$0xff]
        %v402 = vlaneseq
        %v403 = vshrl.u32 %v402, 7
        %v404 = vsub.s32 0, %v403
        %v405 = vrot.slane %v314, %v404
        %v406 = vlaneseq
        %v407 = vshrl.u32 %v406, 7
        %v408 = vsub.s32 0, %v407
        %v409 = vrot.slane %v323, %v408
        %v410 = vlaneseq
        %v411 = vshrl.u32 %v410, 7
        %v412 = vsub.s32 0, %v411
        %v413 = vrot.slane %v332, %v412
        %v414 = vlaneseq
        %v415 = vshrl.u32 %v414, 7
        %v416 = vsub.s32 0, %v415
        %v417 = vrot.slane %v341, %v416
        %418 = vset.pattern.permute.xlu0 0
        %419 = vperm.xlu0 %418, %v405
        %v420 = vpop.permute.xlu0 %419
        %422 = vset.pattern.permute.xlu0 0
        %423 = vperm.xlu0 %422, %v409
        %v424 = vpop.permute.xlu0 %423
        %426 = vset.pattern.permute.xlu0 0
        %427 = vperm.xlu0 %426, %v413
        %v428 = vpop.permute.xlu0 %427
        %430 = vset.pattern.permute.xlu0 0
        %431 = vperm.xlu0 %430, %v417
        %v432 = vpop.permute.xlu0 %431
        %v434 = vmul.f32 %v390, %v420
        %v435 = vmul.f32 %v391, %v420
        %v436 = vmul.f32 %v392, %v424
        %v437 = vmul.f32 %v393, %v424
        %v438 = vmul.f32 %v394, %v428
        %v439 = vmul.f32 %v395, %v428
        %v440 = vmul.f32 %v396, %v432
        %v441 = vmul.f32 %v397, %v432
        %v442 = vadd.f32 %v376, %v434
        %v443 = vadd.f32 %v376, %v435
        %v444 = vadd.f32 %v380, %v436
        %v445 = vadd.f32 %v380, %v437
        %v446 = vadd.f32 %v384, %v438
        %v447 = vadd.f32 %v384, %v439
        %v448 = vadd.f32 %v388, %v440
        %v449 = vadd.f32 %v388, %v441
        %v454 = vlaneseq
        %v455 = vshrl.u32 %v454, 7
        %v456 = vsub.s32 0, %v455
        %v457 = vrot.slane %v315, %v456
        %v458 = vlaneseq
        %v459 = vshrl.u32 %v458, 7
        %v460 = vsub.s32 0, %v459
        %v461 = vrot.slane %v324, %v460
        %v462 = vlaneseq
        %v463 = vshrl.u32 %v462, 7
        %v464 = vsub.s32 0, %v463
        %v465 = vrot.slane %v333, %v464
        %v466 = vlaneseq
        %v467 = vshrl.u32 %v466, 7
        %v468 = vsub.s32 0, %v467
        %v469 = vrot.slane %v342, %v468
        %470 = vset.pattern.permute.xlu0 0
        %471 = vperm.xlu0 %470, %v457
        %v472 = vpop.permute.xlu0 %471
        %474 = vset.pattern.permute.xlu0 0
        %475 = vperm.xlu0 %474, %v461
        %v476 = vpop.permute.xlu0 %475
        %478 = vset.pattern.permute.xlu0 0
        %479 = vperm.xlu0 %478, %v465
        %v480 = vpop.permute.xlu0 %479
        %482 = vset.pattern.permute.xlu0 0
        %483 = vperm.xlu0 %482, %v469
        %v484 = vpop.permute.xlu0 %483
        %v486 = vmul.f32 %v390, %v472
        %v487 = vmul.f32 %v391, %v472
        %v488 = vmul.f32 %v392, %v476
        %v489 = vmul.f32 %v393, %v476
        %v490 = vmul.f32 %v394, %v480
        %v491 = vmul.f32 %v395, %v480
        %v492 = vmul.f32 %v396, %v484
        %v493 = vmul.f32 %v397, %v484
        %502 = vrot.lane.b32.xlu0 %v486, 127
        %v503 = vpop.permute.xlu0 %502
        %504 = vrot.lane.b32.xlu0 %v487, 127
        %v505 = vpop.permute.xlu0 %504
        %506 = vrot.lane.b32.xlu0 %v488, 127
        %v507 = vpop.permute.xlu0 %506
        %508 = vrot.lane.b32.xlu0 %v489, 127
        %v509 = vpop.permute.xlu0 %508
        %510 = vrot.lane.b32.xlu0 %v490, 127
        %v511 = vpop.permute.xlu0 %510
        %512 = vrot.lane.b32.xlu0 %v491, 127
        %v513 = vpop.permute.xlu0 %512
        %514 = vrot.lane.b32.xlu0 %v492, 127
        %v515 = vpop.permute.xlu0 %514
        %516 = vrot.lane.b32.xlu0 %v493, 127
        %v517 = vpop.permute.xlu0 %516
        %v526 = vadd.f32 %v442, %v503
        %v527 = vadd.f32 %v443, %v505
        %v528 = vadd.f32 %v444, %v507
        %v529 = vadd.f32 %v445, %v509
        %v530 = vadd.f32 %v446, %v511
        %v531 = vadd.f32 %v447, %v513
        %v532 = vadd.f32 %v448, %v515
        %v533 = vadd.f32 %v449, %v517
        %v538 = vlaneseq
        %v539 = vshrl.u32 %v538, 7
        %v540 = vsub.s32 0, %v539
        %v541 = vrot.slane %v316, %v540
        %v542 = vlaneseq
        %v543 = vshrl.u32 %v542, 7
        %v544 = vsub.s32 0, %v543
        %v545 = vrot.slane %v325, %v544
        %v546 = vlaneseq
        %v547 = vshrl.u32 %v546, 7
        %v548 = vsub.s32 0, %v547
        %v549 = vrot.slane %v334, %v548
        %v550 = vlaneseq
        %v551 = vshrl.u32 %v550, 7
        %v552 = vsub.s32 0, %v551
        %v553 = vrot.slane %v343, %v552
        %554 = vset.pattern.permute.xlu0 0
        %555 = vperm.xlu0 %554, %v541
        %v556 = vpop.permute.xlu0 %555
        %558 = vset.pattern.permute.xlu0 0
        %559 = vperm.xlu0 %558, %v545
        %v560 = vpop.permute.xlu0 %559
        %562 = vset.pattern.permute.xlu0 0
        %563 = vperm.xlu0 %562, %v549
        %v564 = vpop.permute.xlu0 %563
        %566 = vset.pattern.permute.xlu0 0
        %567 = vperm.xlu0 %566, %v553
        %v568 = vpop.permute.xlu0 %567
        %v570 = vmul.f32 %v390, %v556
        %v571 = vmul.f32 %v391, %v556
        %v572 = vmul.f32 %v392, %v560
        %v573 = vmul.f32 %v393, %v560
        %v574 = vmul.f32 %v394, %v564
        %v575 = vmul.f32 %v395, %v564
        %v576 = vmul.f32 %v396, %v568
        %v577 = vmul.f32 %v397, %v568
        %586 = vrot.lane.b32.xlu0 %v570, 126
        %v587 = vpop.permute.xlu0 %586
        %588 = vrot.lane.b32.xlu0 %v571, 126
        %v589 = vpop.permute.xlu0 %588
        %590 = vrot.lane.b32.xlu0 %v572, 126
        %v591 = vpop.permute.xlu0 %590
        %592 = vrot.lane.b32.xlu0 %v573, 126
        %v593 = vpop.permute.xlu0 %592
        %594 = vrot.lane.b32.xlu0 %v574, 126
        %v595 = vpop.permute.xlu0 %594
        %596 = vrot.lane.b32.xlu0 %v575, 126
        %v597 = vpop.permute.xlu0 %596
        %598 = vrot.lane.b32.xlu0 %v576, 126
        %v599 = vpop.permute.xlu0 %598
        %600 = vrot.lane.b32.xlu0 %v577, 126
        %v601 = vpop.permute.xlu0 %600
        %v610 = vadd.f32 %v526, %v587
        %v611 = vadd.f32 %v527, %v589
        %v612 = vadd.f32 %v528, %v591
        %v613 = vadd.f32 %v529, %v593
        %v614 = vadd.f32 %v530, %v595
        %v615 = vadd.f32 %v531, %v597
        %v616 = vadd.f32 %v532, %v599
        %v617 = vadd.f32 %v533, %v601
        %v618 = vld [vmem:[#allocation2 + $0x1] sm:$0xff]
        %v619 = vld [vmem:[#allocation2 + $0x9] sm:$0xff]
        %v620 = vld [vmem:[#allocation2 + $0x19] sm:$0xff]
        %v621 = vld [vmem:[#allocation2 + $0x21] sm:$0xff]
        %v622 = vld [vmem:[#allocation2 + $0x31] sm:$0xff]
        %v623 = vld [vmem:[#allocation2 + $0x39] sm:$0xff]
        %v624 = vld [vmem:[#allocation2 + $0x49] sm:$0xff]
        %v625 = vld [vmem:[#allocation2 + $0x51] sm:$0xff]
        %v630 = vlaneseq
        %v631 = vshrl.u32 %v630, 7
        %v632 = vsub.s32 0, %v631
        %v633 = vrot.slane %v317, %v632
        %v634 = vlaneseq
        %v635 = vshrl.u32 %v634, 7
        %v636 = vsub.s32 0, %v635
        %v637 = vrot.slane %v326, %v636
        %v638 = vlaneseq
        %v639 = vshrl.u32 %v638, 7
        %v640 = vsub.s32 0, %v639
        %v641 = vrot.slane %v335, %v640
        %v642 = vlaneseq
        %v643 = vshrl.u32 %v642, 7
        %v644 = vsub.s32 0, %v643
        %v645 = vrot.slane %v344, %v644
        %646 = vset.pattern.permute.xlu0 0
        %647 = vperm.xlu0 %646, %v633
        %v648 = vpop.permute.xlu0 %647
        %650 = vset.pattern.permute.xlu0 0
        %651 = vperm.xlu0 %650, %v637
        %v652 = vpop.permute.xlu0 %651
        %654 = vset.pattern.permute.xlu0 0
        %655 = vperm.xlu0 %654, %v641
        %v656 = vpop.permute.xlu0 %655
        %658 = vset.pattern.permute.xlu0 0
        %659 = vperm.xlu0 %658, %v645
        %v660 = vpop.permute.xlu0 %659
        %v662 = vmul.f32 %v618, %v648
        %v663 = vmul.f32 %v619, %v648
        %v664 = vmul.f32 %v620, %v652
        %v665 = vmul.f32 %v621, %v652
        %v666 = vmul.f32 %v622, %v656
        %v667 = vmul.f32 %v623, %v656
        %v668 = vmul.f32 %v624, %v660
        %v669 = vmul.f32 %v625, %v660
        %v670 = vadd.f32 %v610, %v662
        %v671 = vadd.f32 %v611, %v663
        %v672 = vadd.f32 %v612, %v664
        %v673 = vadd.f32 %v613, %v665
        %v674 = vadd.f32 %v614, %v666
        %v675 = vadd.f32 %v615, %v667
        %v676 = vadd.f32 %v616, %v668
        %v677 = vadd.f32 %v617, %v669
        %v682 = vlaneseq
        %v683 = vshrl.u32 %v682, 7
        %v684 = vsub.s32 0, %v683
        %v685 = vrot.slane %v318, %v684
        %v686 = vlaneseq
        %v687 = vshrl.u32 %v686, 7
        %v688 = vsub.s32 0, %v687
        %v689 = vrot.slane %v327, %v688
        %v690 = vlaneseq
        %v691 = vshrl.u32 %v690, 7
        %v692 = vsub.s32 0, %v691
        %v693 = vrot.slane %v336, %v692
        %v694 = vlaneseq
        %v695 = vshrl.u32 %v694, 7
        %v696 = vsub.s32 0, %v695
        %v697 = vrot.slane %v345, %v696
        %698 = vset.pattern.permute.xlu0 0
        %699 = vperm.xlu0 %698, %v685
        %v700 = vpop.permute.xlu0 %699
        %702 = vset.pattern.permute.xlu0 0
        %703 = vperm.xlu0 %702, %v689
        %v704 = vpop.permute.xlu0 %703
        %706 = vset.pattern.permute.xlu0 0
        %707 = vperm.xlu0 %706, %v693
        %v708 = vpop.permute.xlu0 %707
        %710 = vset.pattern.permute.xlu0 0
        %711 = vperm.xlu0 %710, %v697
        %v712 = vpop.permute.xlu0 %711
        %v714 = vmul.f32 %v618, %v700
        %v715 = vmul.f32 %v619, %v700
        %v716 = vmul.f32 %v620, %v704
        %v717 = vmul.f32 %v621, %v704
        %v718 = vmul.f32 %v622, %v708
        %v719 = vmul.f32 %v623, %v708
        %v720 = vmul.f32 %v624, %v712
        %v721 = vmul.f32 %v625, %v712
        %730 = vrot.lane.b32.xlu0 %v714, 127
        %v731 = vpop.permute.xlu0 %730
        %732 = vrot.lane.b32.xlu0 %v715, 127
        %v733 = vpop.permute.xlu0 %732
        %734 = vrot.lane.b32.xlu0 %v716, 127
        %v735 = vpop.permute.xlu0 %734
        %736 = vrot.lane.b32.xlu0 %v717, 127
        %v737 = vpop.permute.xlu0 %736
        %738 = vrot.lane.b32.xlu0 %v718, 127
        %v739 = vpop.permute.xlu0 %738
        %740 = vrot.lane.b32.xlu0 %v719, 127
        %v741 = vpop.permute.xlu0 %740
        %742 = vrot.lane.b32.xlu0 %v720, 127
        %v743 = vpop.permute.xlu0 %742
        %744 = vrot.lane.b32.xlu0 %v721, 127
        %v745 = vpop.permute.xlu0 %744
        %v754 = vadd.f32 %v670, %v731
        %v755 = vadd.f32 %v671, %v733
        %v756 = vadd.f32 %v672, %v735
        %v757 = vadd.f32 %v673, %v737
        %v758 = vadd.f32 %v674, %v739
        %v759 = vadd.f32 %v675, %v741
        %v760 = vadd.f32 %v676, %v743
        %v761 = vadd.f32 %v677, %v745
        %v766 = vlaneseq
        %v767 = vshrl.u32 %v766, 7
        %v768 = vsub.s32 0, %v767
        %v769 = vrot.slane %v319, %v768
        %v770 = vlaneseq
        %v771 = vshrl.u32 %v770, 7
        %v772 = vsub.s32 0, %v771
        %v773 = vrot.slane %v328, %v772
        %v774 = vlaneseq
        %v775 = vshrl.u32 %v774, 7
        %v776 = vsub.s32 0, %v775
        %v777 = vrot.slane %v337, %v776
        %v778 = vlaneseq
        %v779 = vshrl.u32 %v778, 7
        %v780 = vsub.s32 0, %v779
        %v781 = vrot.slane %v346, %v780
        %782 = vset.pattern.permute.xlu0 0
        %783 = vperm.xlu0 %782, %v769
        %v784 = vpop.permute.xlu0 %783
        %786 = vset.pattern.permute.xlu0 0
        %787 = vperm.xlu0 %786, %v773
        %v788 = vpop.permute.xlu0 %787
        %790 = vset.pattern.permute.xlu0 0
        %791 = vperm.xlu0 %790, %v777
        %v792 = vpop.permute.xlu0 %791
        %794 = vset.pattern.permute.xlu0 0
        %795 = vperm.xlu0 %794, %v781
        %v796 = vpop.permute.xlu0 %795
        %v798 = vmul.f32 %v618, %v784
        %v799 = vmul.f32 %v619, %v784
        %v800 = vmul.f32 %v620, %v788
        %v801 = vmul.f32 %v621, %v788
        %v802 = vmul.f32 %v622, %v792
        %v803 = vmul.f32 %v623, %v792
        %v804 = vmul.f32 %v624, %v796
        %v805 = vmul.f32 %v625, %v796
        %814 = vrot.lane.b32.xlu0 %v798, 126
        %v815 = vpop.permute.xlu0 %814
        %816 = vrot.lane.b32.xlu0 %v799, 126
        %v817 = vpop.permute.xlu0 %816
        %818 = vrot.lane.b32.xlu0 %v800, 126
        %v819 = vpop.permute.xlu0 %818
        %820 = vrot.lane.b32.xlu0 %v801, 126
        %v821 = vpop.permute.xlu0 %820
        %822 = vrot.lane.b32.xlu0 %v802, 126
        %v823 = vpop.permute.xlu0 %822
        %824 = vrot.lane.b32.xlu0 %v803, 126
        %v825 = vpop.permute.xlu0 %824
        %826 = vrot.lane.b32.xlu0 %v804, 126
        %v827 = vpop.permute.xlu0 %826
        %828 = vrot.lane.b32.xlu0 %v805, 126
        %v829 = vpop.permute.xlu0 %828
        %v838 = vadd.f32 %v754, %v815
        %v839 = vadd.f32 %v755, %v817
        %v840 = vadd.f32 %v756, %v819
        %v841 = vadd.f32 %v757, %v821
        %v842 = vadd.f32 %v758, %v823
        %v843 = vadd.f32 %v759, %v825
        %v844 = vadd.f32 %v760, %v827
        %v845 = vadd.f32 %v761, %v829
        %v846 = vld [vmem:[#allocation2 + $0x2] sm:$0xff]
        %v847 = vld [vmem:[#allocation2 + $0xa] sm:$0xff]
        %v848 = vld [vmem:[#allocation2 + $0x1a] sm:$0xff]
        %v849 = vld [vmem:[#allocation2 + $0x22] sm:$0xff]
        %v850 = vld [vmem:[#allocation2 + $0x32] sm:$0xff]
        %v851 = vld [vmem:[#allocation2 + $0x3a] sm:$0xff]
        %v852 = vld [vmem:[#allocation2 + $0x4a] sm:$0xff]
        %v853 = vld [vmem:[#allocation2 + $0x52] sm:$0xff]
        %v858 = vlaneseq
        %v859 = vshrl.u32 %v858, 7
        %v860 = vsub.s32 0, %v859
        %v861 = vrot.slane %v320, %v860
        %v862 = vlaneseq
        %v863 = vshrl.u32 %v862, 7
        %v864 = vsub.s32 0, %v863
        %v865 = vrot.slane %v329, %v864
        %v866 = vlaneseq
        %v867 = vshrl.u32 %v866, 7
        %v868 = vsub.s32 0, %v867
        %v869 = vrot.slane %v338, %v868
        %v870 = vlaneseq
        %v871 = vshrl.u32 %v870, 7
        %v872 = vsub.s32 0, %v871
        %v873 = vrot.slane %v347, %v872
        %874 = vset.pattern.permute.xlu0 0
        %875 = vperm.xlu0 %874, %v861
        %v876 = vpop.permute.xlu0 %875
        %878 = vset.pattern.permute.xlu0 0
        %879 = vperm.xlu0 %878, %v865
        %v880 = vpop.permute.xlu0 %879
        %882 = vset.pattern.permute.xlu0 0
        %883 = vperm.xlu0 %882, %v869
        %v884 = vpop.permute.xlu0 %883
        %886 = vset.pattern.permute.xlu0 0
        %887 = vperm.xlu0 %886, %v873
        %v888 = vpop.permute.xlu0 %887
        %v890 = vmul.f32 %v846, %v876
        %v891 = vmul.f32 %v847, %v876
        %v892 = vmul.f32 %v848, %v880
        %v893 = vmul.f32 %v849, %v880
        %v894 = vmul.f32 %v850, %v884
        %v895 = vmul.f32 %v851, %v884
        %v896 = vmul.f32 %v852, %v888
        %v897 = vmul.f32 %v853, %v888
        %v898 = vadd.f32 %v838, %v890
        %v899 = vadd.f32 %v839, %v891
        %v900 = vadd.f32 %v840, %v892
        %v901 = vadd.f32 %v841, %v893
        %v902 = vadd.f32 %v842, %v894
        %v903 = vadd.f32 %v843, %v895
        %v904 = vadd.f32 %v844, %v896
        %v905 = vadd.f32 %v845, %v897
        %v910 = vlaneseq
        %v911 = vshrl.u32 %v910, 7
        %v912 = vsub.s32 0, %v911
        %v913 = vrot.slane %v321, %v912
        %v914 = vlaneseq
        %v915 = vshrl.u32 %v914, 7
        %v916 = vsub.s32 0, %v915
        %v917 = vrot.slane %v330, %v916
        %v918 = vlaneseq
        %v919 = vshrl.u32 %v918, 7
        %v920 = vsub.s32 0, %v919
        %v921 = vrot.slane %v339, %v920
        %v922 = vlaneseq
        %v923 = vshrl.u32 %v922, 7
        %v924 = vsub.s32 0, %v923
        %v925 = vrot.slane %v348, %v924
        %926 = vset.pattern.permute.xlu0 0
        %927 = vperm.xlu0 %926, %v913
        %v928 = vpop.permute.xlu0 %927
        %930 = vset.pattern.permute.xlu0 0
        %931 = vperm.xlu0 %930, %v917
        %v932 = vpop.permute.xlu0 %931
        %934 = vset.pattern.permute.xlu0 0
        %935 = vperm.xlu0 %934, %v921
        %v936 = vpop.permute.xlu0 %935
        %938 = vset.pattern.permute.xlu0 0
        %939 = vperm.xlu0 %938, %v925
        %v940 = vpop.permute.xlu0 %939
        %v942 = vmul.f32 %v846, %v928
        %v943 = vmul.f32 %v847, %v928
        %v944 = vmul.f32 %v848, %v932
        %v945 = vmul.f32 %v849, %v932
        %v946 = vmul.f32 %v850, %v936
        %v947 = vmul.f32 %v851, %v936
        %v948 = vmul.f32 %v852, %v940
        %v949 = vmul.f32 %v853, %v940
        %958 = vrot.lane.b32.xlu0 %v942, 127
        %v959 = vpop.permute.xlu0 %958
        %960 = vrot.lane.b32.xlu0 %v943, 127
        %v961 = vpop.permute.xlu0 %960
        %962 = vrot.lane.b32.xlu0 %v944, 127
        %v963 = vpop.permute.xlu0 %962
        %964 = vrot.lane.b32.xlu0 %v945, 127
        %v965 = vpop.permute.xlu0 %964
        %966 = vrot.lane.b32.xlu0 %v946, 127
        %v967 = vpop.permute.xlu0 %966
        %968 = vrot.lane.b32.xlu0 %v947, 127
        %v969 = vpop.permute.xlu0 %968
        %970 = vrot.lane.b32.xlu0 %v948, 127
        %v971 = vpop.permute.xlu0 %970
        %972 = vrot.lane.b32.xlu0 %v949, 127
        %v973 = vpop.permute.xlu0 %972
        %v982 = vadd.f32 %v898, %v959
        %v983 = vadd.f32 %v899, %v961
        %v984 = vadd.f32 %v900, %v963
        %v985 = vadd.f32 %v901, %v965
        %v986 = vadd.f32 %v902, %v967
        %v987 = vadd.f32 %v903, %v969
        %v988 = vadd.f32 %v904, %v971
        %v989 = vadd.f32 %v905, %v973
        %v994 = vlaneseq
        %v995 = vshrl.u32 %v994, 7
        %v996 = vsub.s32 0, %v995
        %v997 = vrot.slane %v322, %v996
        %v998 = vlaneseq
        %v999 = vshrl.u32 %v998, 7
        %v1000 = vsub.s32 0, %v999
        %v1001 = vrot.slane %v331, %v1000
        %v1002 = vlaneseq
        %v1003 = vshrl.u32 %v1002, 7
        %v1004 = vsub.s32 0, %v1003
        %v1005 = vrot.slane %v340, %v1004
        %v1006 = vlaneseq
        %v1007 = vshrl.u32 %v1006, 7
        %v1008 = vsub.s32 0, %v1007
        %v1009 = vrot.slane %v349, %v1008
        %1010 = vset.pattern.permute.xlu0 0
        %1011 = vperm.xlu0 %1010, %v997
        %v1012 = vpop.permute.xlu0 %1011
        %1014 = vset.pattern.permute.xlu0 0
        %1015 = vperm.xlu0 %1014, %v1001
        %v1016 = vpop.permute.xlu0 %1015
        %1018 = vset.pattern.permute.xlu0 0
        %1019 = vperm.xlu0 %1018, %v1005
        %v1020 = vpop.permute.xlu0 %1019
        %1022 = vset.pattern.permute.xlu0 0
        %1023 = vperm.xlu0 %1022, %v1009
        %v1024 = vpop.permute.xlu0 %1023
        %v1026 = vmul.f32 %v846, %v1012
        %v1027 = vmul.f32 %v847, %v1012
        %v1028 = vmul.f32 %v848, %v1016
        %v1029 = vmul.f32 %v849, %v1016
        %v1030 = vmul.f32 %v850, %v1020
        %v1031 = vmul.f32 %v851, %v1020
        %v1032 = vmul.f32 %v852, %v1024
        %v1033 = vmul.f32 %v853, %v1024
        %1042 = vrot.lane.b32.xlu0 %v1026, 126
        %v1043 = vpop.permute.xlu0 %1042
        %1044 = vrot.lane.b32.xlu0 %v1027, 126
        %v1045 = vpop.permute.xlu0 %1044
        %1046 = vrot.lane.b32.xlu0 %v1028, 126
        %v1047 = vpop.permute.xlu0 %1046
        %1048 = vrot.lane.b32.xlu0 %v1029, 126
        %v1049 = vpop.permute.xlu0 %1048
        %1050 = vrot.lane.b32.xlu0 %v1030, 126
        %v1051 = vpop.permute.xlu0 %1050
        %1052 = vrot.lane.b32.xlu0 %v1031, 126
        %v1053 = vpop.permute.xlu0 %1052
        %1054 = vrot.lane.b32.xlu0 %v1032, 126
        %v1055 = vpop.permute.xlu0 %1054
        %1056 = vrot.lane.b32.xlu0 %v1033, 126
        %v1057 = vpop.permute.xlu0 %1056
        %v1066 = vadd.f32 %v982, %v1043
        %v1067 = vadd.f32 %v983, %v1045
        %v1068 = vadd.f32 %v984, %v1047
        %v1069 = vadd.f32 %v985, %v1049
        %v1070 = vadd.f32 %v986, %v1051
        %v1071 = vadd.f32 %v987, %v1053
        %v1072 = vadd.f32 %v988, %v1055
        %v1073 = vadd.f32 %v989, %v1057
        %vm1074 = vcmask 130048
        %1075 = vst.msk [vmem:[%s237] sm:$0xff] %vm1074, %v1066
        %1076 = vst.msk [vmem:[%s237 + $0x8] sm:$0xff] %vm1074, %v1067
        %1077 = vst.msk [vmem:[%s237 + $0x10] sm:$0xff] %vm1074, %v1068
        %1078 = vst.msk [vmem:[%s237 + $0x18] sm:$0xff] %vm1074, %v1069
        %1079 = vst.msk [vmem:[%s237 + $0x20] sm:$0xff] %vm1074, %v1070
        %1080 = vst.msk [vmem:[%s237 + $0x28] sm:$0xff] %vm1074, %v1071
        %1081 = vst.msk [vmem:[%s237 + $0x30] sm:$0xff] %vm1074, %v1072
        %1082 = vst.msk [vmem:[%s237 + $0x38] sm:$0xff] %vm1074, %v1073
        %s1083 = sand.u32 %s122, 1
        %s1084 = scalar_lea.sflag [#allocation5], %s1083
        %s1085 = sand.u32 %s122, 1
        %s1086 = smul.addr %s1085, 64
        %s1087 = scalar_lea.vmem [#allocation6], %s1086
        // Predicated region
        $region37: #{tpu_custom_call.1} parent=31 // pred_check
          %p1088 = pneg %p132
        $region38: #{tpu_custom_call.1} parent=31 // pred_check_branch
          %1090 = sbr.rel (%p1088) target = $region40
        $region39: #{tpu_custom_call.1} parent=31 // pred_region
          %s1091 = smul.u32 4, %s24
          %s1093 = ssub.s32 1024, 1024
          %1094 = vsyncadd %s1084, %s1093
          %s1095 = smul.addr %s1091, 2
          %s1096 = smul.addr %s25, 8
          %s1097 = sadd.s32 %s1095, %s1096
          %s1098 = smul.addr %s1097, 128
          %s1099 = scalar_lea.hbm %s3, %s1098
          %s1100 = sshll.u32 %s1087, 4
          %s1101 = int_to_ptr.vmem [resolvable:$true] %s1100
          %1106 = dma.vmem_to_hbm [thread:$0]  %s1101, 1024, %s1099, %s1084, 128, 128, 8
        $region40: #{tpu_custom_call.1} parent=31 // pred_fallthru
          _
      $region32: #{tpu_custom_call.1} parent=5 // pred_fallthru
        _
      %p1107 = scmp.le.s32.totalorder 2, %s15
      // Predicated region
      $region41: #{tpu_custom_call.1} parent=5 // pred_check
        %p1108 = pneg %p1107
      $region42: #{tpu_custom_call.1} parent=5 // pred_check_branch
        %1110 = sbr.rel (%p1108) target = $region44
      $region43: #{tpu_custom_call.1} parent=5 // pred_region
        %s1111 = ssub.s32 %s15, 2
        // Predicated region
        $region45: #{tpu_custom_call.1} parent=43 // pred_check
          %p1112 = pneg %p138
        $region46: #{tpu_custom_call.1} parent=43 // pred_check_branch
          %1114 = sbr.rel (%p1112) target = $region48
        $region47: #{tpu_custom_call.1} parent=43 // pred_region
          %s1115 = sand.u32 %s123, 1
          %s1116 = scalar_lea.sflag [#allocation5], %s1115
          %s1117 = sand.u32 %s123, 1
          %s1118 = smul.addr %s1117, 64
          %s1119 = scalar_lea.vmem [#allocation6], %s1118
          %1120 = dma.done %s1116, 1024
        $region48: #{tpu_custom_call.1} parent=43 // pred_fallthru
          _
      $region44: #{tpu_custom_call.1} parent=5 // pred_fallthru
        _
    $region6: #{tpu_custom_call.1} parent=1 // loop_footer
      %s19 = sadd.s32 1, %s15
    $region7: #{tpu_custom_call.1} parent=1 // loop_footer_branch
      %14 = sbr.rel target = $region3
    $region8: #{tpu_custom_call.1} parent=1 // loop_exit
      _
    %1121 = vsyncpa [#allocation4], 1
    %s1122 = scalar_lea.sflag [#allocation4], 1
    %1123 = vsyncpa %s1122, 1
    %1124 = vsyncpa [#allocation5], 1
    %s1125 = scalar_lea.sflag [#allocation5], 1
    %1126 = vsyncpa %s1125, 1

</llo_original>
